<compile_context>
chip_gen: v5e
topology: v5e:2x2
jax: 0.10.0
libtpu: 0.0.40
codegen_flags: <defaults>
</compile_context>

<pallas_src>
import functools

import jax
import jax.numpy as jnp
from jax.experimental import pallas as pl
from jax.experimental.pallas import tpu as pltpu

_LANE = 128
_SUBLANE = 8


def _cdiv(a, b):
    return (a + b - 1) // b


def _round_up(x, m):
    return _cdiv(x, m) * m


def _gcn_kernel(a_ref, x_ref, wt_ref, b_ref, o_ref, acc_ref, *,
                n_nodes, mask_k):
    """One grid step of out = relu(A @ (X @ W^T) + b).

    a_ref:   (bt, tm, tk)      adjacency tile(s)        (f32 or bf16)
    x_ref:   (bt, tk, Fin)     feature tile(s)          (f32)
    wt_ref:  (Fin, Fout_p)     transposed linear weight (zero padded)
    b_ref:   (1, Fout_p)       bias                     (f32, zero padded)
    o_ref:   (bt, tm, Fout_p)  output tile(s)
    acc_ref: (bt, tm, Fout_p)  f32 accumulator (lane-dense)
    """
    k = pl.program_id(2)

    @pl.when(k == 0)
    def _init():
        acc_ref[...] = jnp.zeros_like(acc_ref)

    a = a_ref[...]
    x = x_ref[...]

    if mask_k:
        # The last k tile overhangs the unpadded arrays in HBM: zero the
        # out-of-range columns of A and rows of X so undefined overhang data
        # cannot contaminate the accumulator of valid rows.
        tk = a.shape[-1]
        k_start = k * tk
        col_ids = jax.lax.broadcasted_iota(jnp.int32, (1, 1, tk), 2) + k_start
        row_ids = jax.lax.broadcasted_iota(jnp.int32, (1, tk, 1), 1) + k_start
        a = jnp.where(col_ids < n_nodes, a, 0.0)
        x = jnp.where(row_ids < n_nodes, x, 0.0)

    # xw = X_tile @ W^T : (bt, tk, Fout_p).  Tiny Fin-deep matmul; keeps the
    # whole layer fused in one kernel with no XW round-trip through HBM.
    xw = jax.lax.dot_general(
        x, wt_ref[...],
        dimension_numbers=(((2,), (0,)), ((), ())),
        preferred_element_type=jnp.float32,
    ).astype(a.dtype)

    # acc += A_tile @ xw  (batched over bt, lane-dense 128 output columns,
    # f32 accumulation).
    acc_ref[...] += jax.lax.dot_general(
        a, xw,
        dimension_numbers=(((2,), (1,)), ((0,), (0,))),
        preferred_element_type=jnp.float32,
    )

    @pl.when(k == pl.num_programs(2) - 1)
    def _finalize():
        y = acc_ref[...] + b_ref[...]          # bias broadcasts over (bt, tm)
        o_ref[...] = jnp.maximum(y, 0.0).astype(o_ref.dtype)


def _vmem_defaults():
    """(vmem_limit_bytes, vmem_tile_budget) based on this chip's VMEM size."""
    cap = 128 * 1024 * 1024
    try:
        info = pltpu.get_tpu_info()
        cap = int(getattr(info, "vmem_capacity_bytes", cap))
    except Exception:
        pass
    if cap <= 64 * 1024 * 1024:                       # v7x: 64 MiB / TC
        return 32 * 1024 * 1024, 14 * 1024 * 1024
    return 48 * 1024 * 1024, 24 * 1024 * 1024         # v5e / v6e: 128 MiB


def graph_conv_layer(X, A, W, bias, *,
                     block_m=512, block_k=1024,
                     a_dtype=None,
                     vmem_limit_bytes=None,
                     vmem_tile_budget=None):
    """relu((A @ X) @ W^T + bias), computed as relu(A @ (X @ W^T) + bias).

    X:    [B, N, Fin]   float32
    A:    [B, N, N]     float32
    W:    [Fout, Fin]   float32  (PyTorch nn.Linear weight layout)
    bias: [Fout]        float32
    a_dtype: optional streaming dtype for A (e.g. jnp.bfloat16), f32 accum.
    returns: [B, N, Fout] in X.dtype
    """
    B, N, Fin = X.shape
    Fout = W.shape[0]
    out_dtype = X.dtype

    assert block_m % _SUBLANE == 0 and block_k % _LANE == 0
    default_limit, default_budget = _vmem_defaults()
    if vmem_limit_bytes is None:
        vmem_limit_bytes = default_limit
    if vmem_tile_budget is None:
        vmem_tile_budget = default_budget

    # ---- lane-dense output features: zero-pad Fout up to a multiple of 128 -
    Fout_p = _round_up(Fout, _LANE)
    wt = jnp.zeros((Fin, Fout_p), dtype=W.dtype).at[:, :Fout].set(W.T)
    b2 = jnp.zeros((1, Fout_p), dtype=jnp.float32).at[:, :Fout].set(
        bias.astype(jnp.float32))

    # ---- tile sizes; A and X are never copied/padded in HBM ----
    tm = block_m if N > block_m else N       # block == full dim is legal
    tk = block_k if N > block_k else N
    num_i = _cdiv(N, tm)
    num_k = _cdiv(N, tk)
    nm_p = num_i * tm                        # only the *output* rows padded

    # ---- optional narrow streaming dtype for the dominant operand A ----
    A_in = A if a_dtype is None else A.astype(a_dtype)
    esz_a = A_in.dtype.itemsize
    esz_x = X.dtype.itemsize
    esz_o = jnp.dtype(out_dtype).itemsize

    # ---- batch elements per grid step (amortise ~0.35us/step overhead) ----
    # Double-buffered inputs/outputs + single f32 accumulator, real dtypes.
    per_batch = (2 * tm * tk * esz_a + 2 * tk * Fin * esz_x
                 + 2 * tm * Fout_p * esz_o + tm * Fout_p * 4)
    fixed = 2 * (Fin * Fout_p * 4 + Fout_p * 4)
    # Keep >= 2 iterations on the parallel grid axes when possible so both
    # TensorCores get work on v7x (harmless on single-core v5e/v6e).
    min_parallel = 2 if B * num_i >= 2 else 1
    bt = 1
    for cand in range(B, 0, -1):
        if B % cand:
            continue
        if fixed + cand * per_batch > vmem_tile_budget:
            continue
        if (B // cand) * num_i < min_parallel:
            continue
        bt = cand
        break

    grid = (B // bt, num_i, num_k)

    out = pl.pallas_call(
        functools.partial(_gcn_kernel, n_nodes=N, mask_k=(N % tk != 0)),
        out_shape=jax.ShapeDtypeStruct((B, nm_p, Fout_p), out_dtype),
        grid_spec=pltpu.PrefetchScalarGridSpec(
            num_scalar_prefetch=0,
            grid=grid,
            in_specs=[
                pl.BlockSpec((bt, tm, tk), lambda b, i, k: (b, i, k)),    # A
                pl.BlockSpec((bt, tk, Fin), lambda b, i, k: (b, k, 0)),   # X
                pl.BlockSpec((Fin, Fout_p), lambda b, i, k: (0, 0)),      # W^T
                pl.BlockSpec((1, Fout_p), lambda b, i, k: (0, 0)),        # bias
            ],
            out_specs=pl.BlockSpec((bt, tm, Fout_p),
                                   lambda b, i, k: (b, i, 0)),
            scratch_shapes=[pltpu.VMEM((bt, tm, Fout_p), jnp.float32)],
        ),
        compiler_params=pltpu.CompilerParams(
            dimension_semantics=("parallel", "parallel", "arbitrary"),
            vmem_limit_bytes=vmem_limit_bytes,
        ),
    )(A_in, X, wt, b2)

    # Slice off node-row and feature padding of the output allocation.
    return out[:, :N, :Fout]


def _reference(X, A, W, bias):
    ax = jnp.einsum("bnm,bmf->bnf", A, X,
                    precision=jax.lax.Precision.HIGHEST)
    y = jnp.einsum("bnf,of->bno", ax, W,
                   precision=jax.lax.Precision.HIGHEST) + bias
    return jnp.maximum(y, 0.0)


if __name__ == "__main__":
    key = jax.random.PRNGKey(0)
    keys = jax.random.split(key, 8)

    # ----- test 1: small shapes implied by the module's forward -----
    B, N, Fin, Fout = 2, 8, 16, 32
    X = jax.random.normal(keys[0], (B, N, Fin), dtype=jnp.float32)
    A = jax.random.normal(keys[1], (B, N, N), dtype=jnp.float32)
    bound = 1.0 / (Fin ** 0.5)
    W = jax.random.uniform(keys[2], (Fout, Fin), minval=-bound, maxval=bound,
                           dtype=jnp.float32)
    bias = jax.random.uniform(keys[3], (Fout,), minval=-bound, maxval=bound,
                              dtype=jnp.float32)

    out = jax.block_until_ready(graph_conv_layer(X, A, W, bias))
    ref = _reference(X, A, W, bias)
    assert out.shape == (B, N, Fout)
    assert jnp.allclose(out, ref, atol=1e-4, rtol=1e-4)

    # ----- test 2: larger graph; (a) single full-dim tile, (b) tiled with
    # ragged k/i tails exercising the in-kernel masking (no HBM padding) -----
    B2, N2 = 2, 200
    X2 = jax.random.normal(keys[4], (B2, N2, Fin), dtype=jnp.float32)
    A2 = jax.random.normal(keys[5], (B2, N2, N2), dtype=jnp.float32)
    ref2 = _reference(X2, A2, W, bias)

    out2a = jax.block_until_ready(graph_conv_layer(X2, A2, W, bias))
    assert out2a.shape == (B2, N2, Fout)
    assert jnp.allclose(out2a, ref2, atol=2e-3, rtol=2e-3)

    out2b = jax.block_until_ready(
        graph_conv_layer(X2, A2, W, bias, block_m=128, block_k=128))
    assert out2b.shape == (B2, N2, Fout)
    assert jnp.allclose(out2b, ref2, atol=2e-3, rtol=2e-3)

    # ----- test 3: bf16-streamed A (halves HBM traffic of the dominant
    # operand; f32 accumulation) -----
    out_bf16 = jax.block_until_ready(
        graph_conv_layer(X, A, W, bias, a_dtype=jnp.bfloat16))
    assert jnp.allclose(out_bf16, ref, atol=5e-2, rtol=5e-2)

    print("KERNEL_OK")
</pallas_src>

<mosaic_0001>
module attributes {stable_mosaic.version = 11 : i64} {
  func.func @_gcn_kernel(%arg0: i32, %arg1: i32, %arg2: i32, %arg3: memref<1x8x8xf32, #tpu.memory_space<vmem>>, %arg4: memref<1x8x16xf32, #tpu.memory_space<vmem>>, %arg5: memref<16x128xf32, #tpu.memory_space<vmem>>, %arg6: memref<1x128xf32, #tpu.memory_space<vmem>>, %arg7: memref<1x8x128xf32, #tpu.memory_space<vmem>>, %arg8: memref<1x8x128xf32, #tpu.memory_space<vmem>>) attributes {dimension_semantics = [#tpu.dimension_semantics<parallel>, #tpu.dimension_semantics<parallel>, #tpu.dimension_semantics<arbitrary>], iteration_bounds = array<i64: 2, 1, 1>, scalar_prefetch = 0 : i64, scratch_operands = 1 : i64, tpu.core_type = #tpu.core_type<tc>, window_params = [{transform_indices = @transform_0, window_bounds = array<i64: 1, 8, 8>}, {transform_indices = @transform_1, window_bounds = array<i64: 1, 8, 16>}, {pipeline_mode = #tpu.pipeline_mode<synchronous>, transform_indices = @transform_2, window_bounds = array<i64: 16, 128>}, {pipeline_mode = #tpu.pipeline_mode<synchronous>, transform_indices = @transform_3, window_bounds = array<i64: 1, 128>}, {transform_indices = @transform_4, window_bounds = array<i64: 1, 8, 128>}]} {
    %c0_i32 = arith.constant 0 : i32
    %0 = arith.cmpi eq, %arg2, %c0_i32 : i32
    %1 = arith.extui %0 : i1 to i32
    %c0_i32_0 = arith.constant 0 : i32
    %2 = arith.cmpi ne, %1, %c0_i32_0 : i32
    scf.if %2 {
      %cst_17 = arith.constant 0.000000e+00 : f32
      %14 = vector.broadcast %cst_17 : f32 to vector<1x8x128xf32>
      %c0_18 = arith.constant 0 : index
      %c0_19 = arith.constant 0 : index
      %c0_20 = arith.constant 0 : index
      %15 = vector.load %arg8[%c0_18, %c0_19, %c0_20] : memref<1x8x128xf32, #tpu.memory_space<vmem>>, vector<1x8x128xf32>
      tpu.vector_store %arg8[%c0_18, %c0_19, %c0_20], %14 {strides = array<i32>} : memref<1x8x128xf32, #tpu.memory_space<vmem>>, vector<1x8x128xf32>,
    } else {
    }
    %c0 = arith.constant 0 : index
    %c0_1 = arith.constant 0 : index
    %c0_2 = arith.constant 0 : index
    %3 = vector.load %arg3[%c0, %c0_1, %c0_2] : memref<1x8x8xf32, #tpu.memory_space<vmem>>, vector<1x8x8xf32>
    %c0_3 = arith.constant 0 : index
    %c0_4 = arith.constant 0 : index
    %c0_5 = arith.constant 0 : index
    %4 = vector.load %arg4[%c0_3, %c0_4, %c0_5] : memref<1x8x16xf32, #tpu.memory_space<vmem>>, vector<1x8x16xf32>
    %c0_6 = arith.constant 0 : index
    %c0_7 = arith.constant 0 : index
    %5 = vector.load %arg5[%c0_6, %c0_7] : memref<16x128xf32, #tpu.memory_space<vmem>>, vector<16x128xf32>
    %cst = arith.constant dense<0.000000e+00> : vector<1x8x128xf32>
    %6 = tpu.matmul %4, %5, %cst {dimension_numbers = #tpu.dot_dimension_numbers<[2], [0], [0, 1], [1], [0, 0, 0, 1, 1, 1], [], []>} : vector<1x8x16xf32>, vector<16x128xf32>, vector<1x8x128xf32> -> vector<1x8x128xf32>
    %c0_8 = arith.constant 0 : index
    %c0_9 = arith.constant 0 : index
    %c0_10 = arith.constant 0 : index
    %7 = vector.load %arg8[%c0_8, %c0_9, %c0_10] : memref<1x8x128xf32, #tpu.memory_space<vmem>>, vector<1x8x128xf32>
    %cst_11 = arith.constant dense<0.000000e+00> : vector<1x8x128xf32>
    %8 = tpu.matmul %3, %6, %cst_11 {dimension_numbers = #tpu.dot_dimension_numbers<[2], [1], [1], [2], [0, 0, 0, 1, 1, 2], [0], [0]>} : vector<1x8x8xf32>, vector<1x8x128xf32>, vector<1x8x128xf32> -> vector<1x8x128xf32>
    %9 = arith.addf %7, %8 : vector<1x8x128xf32>
    %c0_12 = arith.constant 0 : index
    %c0_13 = arith.constant 0 : index
    %c0_14 = arith.constant 0 : index
    %10 = vector.load %arg8[%c0_12, %c0_13, %c0_14] : memref<1x8x128xf32, #tpu.memory_space<vmem>>, vector<1x8x128xf32>
    tpu.vector_store %arg8[%c0_12, %c0_13, %c0_14], %9 {strides = array<i32>} : memref<1x8x128xf32, #tpu.memory_space<vmem>>, vector<1x8x128xf32>,
    %c0_i32_15 = arith.constant 0 : i32
    %11 = arith.cmpi eq, %arg2, %c0_i32_15 : i32
    %12 = arith.extui %11 : i1 to i32
    %c0_i32_16 = arith.constant 0 : i32
    %13 = arith.cmpi ne, %12, %c0_i32_16 : i32
    scf.if %13 {
      %c0_17 = arith.constant 0 : index
      %c0_18 = arith.constant 0 : index
      %c0_19 = arith.constant 0 : index
      %14 = vector.load %arg8[%c0_17, %c0_18, %c0_19] : memref<1x8x128xf32, #tpu.memory_space<vmem>>, vector<1x8x128xf32>
      %c0_20 = arith.constant 0 : index
      %c0_21 = arith.constant 0 : index
      %15 = vector.load %arg6[%c0_20, %c0_21] : memref<1x128xf32, #tpu.memory_space<vmem>>, vector<1x128xf32>
      %16 = vector.shape_cast %15 : vector<1x128xf32> to vector<1x1x128xf32>
      %17 = vector.broadcast %16 : vector<1x1x128xf32> to vector<1x8x128xf32>
      %18 = arith.addf %14, %17 : vector<1x8x128xf32>
      %cst_22 = arith.constant 0.000000e+00 : f32
      %19 = vector.broadcast %cst_22 : f32 to vector<1x8x128xf32>
      %20 = arith.maximumf %18, %19 : vector<1x8x128xf32>
      %c0_23 = arith.constant 0 : index
      %c0_24 = arith.constant 0 : index
      %c0_25 = arith.constant 0 : index
      %21 = vector.load %arg7[%c0_23, %c0_24, %c0_25] : memref<1x8x128xf32, #tpu.memory_space<vmem>>, vector<1x8x128xf32>
      tpu.vector_store %arg7[%c0_23, %c0_24, %c0_25], %20 {strides = array<i32>} : memref<1x8x128xf32, #tpu.memory_space<vmem>>, vector<1x8x128xf32>,
    } else {
    }
    return
  }
  func.func @transform_0(%arg0: i32, %arg1: i32, %arg2: i32) -> (i32, i32, i32) {
    %c0_i32 = arith.constant 0 : i32
    return %arg0, %arg1, %arg2 : i32, i32, i32
  }
  func.func @transform_1(%arg0: i32, %arg1: i32, %arg2: i32) -> (i32, i32, i32) {
    %c0_i32 = arith.constant 0 : i32
    %c0_i32_0 = arith.constant 0 : i32
    return %arg0, %arg2, %c0_i32 : i32, i32, i32
  }
  func.func @transform_2(%arg0: i32, %arg1: i32, %arg2: i32) -> (i32, i32) {
    %c0_i32 = arith.constant 0 : i32
    %c0_i32_0 = arith.constant 0 : i32
    %c0_i32_1 = arith.constant 0 : i32
    return %c0_i32, %c0_i32_0 : i32, i32
  }
  func.func @transform_3(%arg0: i32, %arg1: i32, %arg2: i32) -> (i32, i32) {
    %c0_i32 = arith.constant 0 : i32
    %c0_i32_0 = arith.constant 0 : i32
    %c0_i32_1 = arith.constant 0 : i32
    return %c0_i32, %c0_i32_0 : i32, i32
  }
  func.func @transform_4(%arg0: i32, %arg1: i32, %arg2: i32) -> (i32, i32, i32) {
    %c0_i32 = arith.constant 0 : i32
    %c0_i32_0 = arith.constant 0 : i32
    return %arg0, %arg1, %c0_i32 : i32, i32, i32
  }
}

</mosaic_0001>

<llo_original>
// kernel: tpu_custom_call.1
$region0: #{tpu_custom_call.1}
  #allocation0 [shape = 'u32[]', space=smem, size = 0x4, offset = 0x4, fixed_abs, tag = 'smem constant byte address 0x4 - core index']
  #allocation1 [shape = 'u32[72,128]{1,0:T(1,128)}', space=vmem, size = 0x9000, scoped, tag = 'internal scratch']
  #allocation2 [shape = 'f32[1,8,128]{2,1,0:T(8,128)}', space=vmem, size = 0x1000, scoped, tag = 'scratch operand']
  %s0 = inlined_call_operand.hbm [shape: f32[2,8,8], index: 0, kind: input, shape index: {}]
  %s1 = inlined_call_operand.hbm [shape: f32[2,8,16], index: 1, kind: input, shape index: {}]
  %s2 = inlined_call_operand.hbm [shape: f32[16,128], index: 2, kind: input, shape index: {}]
  %s3 = inlined_call_operand.vmem [shape: f32[1,128], index: 3, kind: input, shape index: {}]
  %s4 = inlined_call_operand.hbm [shape: f32[2,8,128], index: 4, kind: output, shape index: {}]
  %s5 = sld [smem:[#allocation0]]
  $region69: #{tpu_custom_call.1} parent=0
    _
  %s7 = ssub.s32 1, %s5
  %s8 = scalar_select 0, %s7, %s5
  $region1: #{tpu_custom_call.1} parent=0
    #allocation3 [shape = 'u8[8192]{0}', space=vmem, size = 0x2000, scoped, tag = 'input window, operand 0']
    #allocation4 [shape = 's32[2]{0}', space=sflag, size = 0x8, scoped, tag = 'scoped memory for tpu_custom_call.1']
    #allocation5 [shape = 's32[2]{0}', space=sflag, size = 0x8, scoped, tag = 'scoped memory for tpu_custom_call.1']
    #allocation6 [shape = 'u8[8192]{0}', space=vmem, size = 0x2000, scoped, tag = 'input window, operand 1']
    #allocation7 [shape = 's32[2]{0}', space=sflag, size = 0x8, scoped, tag = 'scoped memory for tpu_custom_call.1']
    #allocation8 [shape = 'u8[8192]{0}', space=vmem, size = 0x2000, scoped, tag = 'input window, operand 2, single buffered']
    #allocation9 [shape = 'u8[8192]{0}', space=vmem, size = 0x2000, scoped, tag = 'output window, operand 0']
    %9 = vsyncpa [#allocation4], 0
    %s10 = scalar_lea.sflag [#allocation4], 1
    %11 = vsyncpa %s10, 0
    %12 = vsyncpa [#allocation7], 0
    %s13 = scalar_lea.sflag [#allocation7], 1
    %14 = vsyncpa %s13, 0
    %15 = vsyncpa [#allocation5], 0
    %s16 = scalar_lea.sflag [#allocation5], 1
    %17 = vsyncpa %s16, 0
    loop: start=0, step=1, limit=4
    $region2: #{tpu_custom_call.1} parent=1 // loop_pre_header
      _
    $region3: #{tpu_custom_call.1} parent=1 // loop_header
      %s19 = sphi 0, %s23
      %p20 = scmp.ge.s32.totalorder %s19, 4
      %s26 = sphi 0, %s45
      %s27 = sphi 0, %s41
      %s28 = sphi 0, %s37
      %s29 = sphi 0, %s26
      %s30 = sphi 0, %s27
      %s31 = sphi 0, %s28
      %s32 = sphi 0, %s29
      %s33 = sphi 0, %s30
      %s34 = sphi 0, %s31
      %s52 = sphi 0, %s54
      %s55 = sphi 0, %s52
      %s56 = sphi 0, %s55
      %s72 = sphi 0, %s56
      %s80 = sphi 0, %s82
      %s83 = sphi 0, %s80
      %s84 = sphi 0, %s83
      %s100 = sphi 0, %s84
      %s104 = sphi 0, %s104
      %s106 = sphi 0, %s104
      %s107 = sphi 0, %s106
      %s121 = sphi 0, %s107
      %s125 = sphi 0, %s125
      %s127 = sphi 0, %s125
      %s128 = sphi 0, %s127
      %s142 = sphi 0, %s128
      %s150 = sphi 0, %s152
      %s153 = sphi 0, %s150
      %s154 = sphi 0, %s153
      %s170 = sphi 0, %s154
    $region4: #{tpu_custom_call.1} parent=1 // loop_header_branch
      %22 = sbr.rel (%p20) target = $region8
    $region5: #{tpu_custom_call.1} parent=1 // loop_body
      %s24 = ssub.s32 %s19, 1
      %s25 = ssub.s32 %s19, 2
      %s35 = sadd.s32 1, %s28
      %p36 = scmp.ge.s32.totalorder %s35, 1
      %s37 = scalar_select %p36, 0, %s35
      %s38 = sadd.s32 1, %s27
      %s39 = scalar_select %p36, %s38, %s27
      %p40 = scmp.ge.s32.totalorder %s39, 1
      %s41 = scalar_select %p40, 0, %s39
      %s42 = sadd.s32 1, %s26
      %s43 = scalar_select %p40, %s42, %s26
      %p44 = scmp.ge.s32.totalorder %s43, 2
      %s45 = scalar_select %p44, 0, %s43
      %s46 = ssub.s32 %s26, %s45
      %s47 = ssub.s32 %s27, %s41
      %s48 = sor.u32 %s46, %s47
      %s49 = ssub.s32 %s28, %s37
      %s50 = sor.u32 %s48, %s49
      %p51 = scmp.eq.s32.totalorder %s50, 0
      %s53 = sadd.s32 %s52, 1
      %s54 = scalar_select %p51, %s52, %s53
      %p57 = pneg %p51
      %p58 = scmp.eq.s32.totalorder %s19, 1
      %p59 = por %p57, %p58
      %p60 = scmp.ne.s32.totalorder %s52, %s55
      %p61 = scmp.eq.s32.totalorder %s19, 0
      %p62 = por %p60, %p61
      %p63 = scmp.ne.s32.totalorder %s52, %s55
      %p64 = scmp.eq.s32.totalorder %s24, 1
      %p65 = por %p63, %p64
      %p66 = scmp.ne.s32.totalorder %s55, %s56
      %p67 = scmp.eq.s32.totalorder %s24, 0
      %p68 = por %p66, %p67
      %p69 = scmp.ne.s32.totalorder %s55, %s56
      %p70 = scmp.eq.s32.totalorder %s25, 1
      %p71 = por %p69, %p70
      %p73 = scmp.ne.s32.totalorder %s56, %s72
      %p74 = scmp.eq.s32.totalorder %s25, 0
      %p75 = por %p73, %p74
      %s76 = ssub.s32 %s26, %s45
      %s77 = ssub.s32 %s28, %s37
      %s78 = sor.u32 %s76, %s77
      %p79 = scmp.eq.s32.totalorder %s78, 0
      %s81 = sadd.s32 %s80, 1
      %s82 = scalar_select %p79, %s80, %s81
      %p85 = pneg %p79
      %p86 = scmp.eq.s32.totalorder %s19, 1
      %p87 = por %p85, %p86
      %p88 = scmp.ne.s32.totalorder %s80, %s83
      %p89 = scmp.eq.s32.totalorder %s19, 0
      %p90 = por %p88, %p89
      %p91 = scmp.ne.s32.totalorder %s80, %s83
      %p92 = scmp.eq.s32.totalorder %s24, 1
      %p93 = por %p91, %p92
      %p94 = scmp.ne.s32.totalorder %s83, %s84
      %p95 = scmp.eq.s32.totalorder %s24, 0
      %p96 = por %p94, %p95
      %p97 = scmp.ne.s32.totalorder %s83, %s84
      %p98 = scmp.eq.s32.totalorder %s25, 1
      %p99 = por %p97, %p98
      %p101 = scmp.ne.s32.totalorder %s84, %s100
      %p102 = scmp.eq.s32.totalorder %s25, 0
      %p103 = por %p101, %p102
      %s105 = sadd.s32 %s104, 1
      %p108 = scmp.eq.s32.totalorder %s19, 1
      %p109 = scmp.ne.s32.totalorder %s104, %s106
      %p110 = scmp.eq.s32.totalorder %s19, 0
      %p111 = por %p109, %p110
      %p112 = scmp.ne.s32.totalorder %s104, %s106
      %p113 = scmp.eq.s32.totalorder %s24, 1
      %p114 = por %p112, %p113
      %p115 = scmp.ne.s32.totalorder %s106, %s107
      %p116 = scmp.eq.s32.totalorder %s24, 0
      %p117 = por %p115, %p116
      %p118 = scmp.ne.s32.totalorder %s106, %s107
      %p119 = scmp.eq.s32.totalorder %s25, 1
      %p120 = por %p118, %p119
      %p122 = scmp.ne.s32.totalorder %s107, %s121
      %p123 = scmp.eq.s32.totalorder %s25, 0
      %p124 = por %p122, %p123
      %s126 = sadd.s32 %s125, 1
      %p129 = scmp.eq.s32.totalorder %s19, 1
      %p130 = scmp.ne.s32.totalorder %s125, %s127
      %p131 = scmp.eq.s32.totalorder %s19, 0
      %p132 = por %p130, %p131
      %p133 = scmp.ne.s32.totalorder %s125, %s127
      %p134 = scmp.eq.s32.totalorder %s24, 1
      %p135 = por %p133, %p134
      %p136 = scmp.ne.s32.totalorder %s127, %s128
      %p137 = scmp.eq.s32.totalorder %s24, 0
      %p138 = por %p136, %p137
      %p139 = scmp.ne.s32.totalorder %s127, %s128
      %p140 = scmp.eq.s32.totalorder %s25, 1
      %p141 = por %p139, %p140
      %p143 = scmp.ne.s32.totalorder %s128, %s142
      %p144 = scmp.eq.s32.totalorder %s25, 0
      %p145 = por %p143, %p144
      %s146 = ssub.s32 %s26, %s45
      %s147 = ssub.s32 %s27, %s41
      %s148 = sor.u32 %s146, %s147
      %p149 = scmp.eq.s32.totalorder %s148, 0
      %s151 = sadd.s32 %s150, 1
      %s152 = scalar_select %p149, %s150, %s151
      %p155 = pneg %p149
      %p156 = scmp.eq.s32.totalorder %s19, 1
      %p157 = por %p155, %p156
      %p158 = scmp.ne.s32.totalorder %s150, %s153
      %p159 = scmp.eq.s32.totalorder %s19, 0
      %p160 = por %p158, %p159
      %p161 = scmp.ne.s32.totalorder %s150, %s153
      %p162 = scmp.eq.s32.totalorder %s24, 1
      %p163 = por %p161, %p162
      %p164 = scmp.ne.s32.totalorder %s153, %s154
      %p165 = scmp.eq.s32.totalorder %s24, 0
      %p166 = por %p164, %p165
      %p167 = scmp.ne.s32.totalorder %s153, %s154
      %p168 = scmp.eq.s32.totalorder %s25, 1
      %p169 = por %p167, %p168
      %p171 = scmp.ne.s32.totalorder %s154, %s170
      %p172 = scmp.eq.s32.totalorder %s25, 0
      %p173 = por %p171, %p172
      %p174 = scmp.le.s32.totalorder 1, %s19
      %p175 = scmp.lt.s32.totalorder %s19, 3
      %p176 = pnand %p174, %p175
      %p177 = pneg %p176
      // Predicated region
      $region9: #{tpu_custom_call.1} parent=5 // pred_check
        _
      $region10: #{tpu_custom_call.1} parent=5 // pred_check_branch
        %179 = sbr.rel (%p176) target = $region12
      $region11: #{tpu_custom_call.1} parent=5 // pred_region
        %s180 = ssub.s32 %s19, 1
        // Predicated region
        $region13: #{tpu_custom_call.1} parent=11 // pred_check
          %p181 = pneg %p117
        $region14: #{tpu_custom_call.1} parent=11 // pred_check_branch
          %183 = sbr.rel (%p181) target = $region16
        $region15: #{tpu_custom_call.1} parent=11 // pred_region
          %185 = vsyncadd [#allocation7], 0
          %s186 = sshll.u32 %s2, 4
          %s187 = int_to_ptr.hbm [resolvable:$true] %s186
          %s188 = sshll.u32 [#allocation8], 4
          %s189 = int_to_ptr.vmem [resolvable:$true] %s188
          %194 = dma.hbm_to_vmem [thread:$0]  %s187, 256, %s189, [#allocation7], 128, 128, 8
        $region16: #{tpu_custom_call.1} parent=11 // pred_fallthru
          _
        // Predicated region
        $region17: #{tpu_custom_call.1} parent=11 // pred_check
          %p195 = pneg %p138
        $region18: #{tpu_custom_call.1} parent=11 // pred_check_branch
          %197 = sbr.rel (%p195) target = $region20
        $region19: #{tpu_custom_call.1} parent=11 // pred_region
          _
        $region20: #{tpu_custom_call.1} parent=11 // pred_fallthru
          _
      $region12: #{tpu_custom_call.1} parent=5 // pred_fallthru
        _
      %p198 = scmp.lt.s32.totalorder %s19, 2
      // Predicated region
      $region21: #{tpu_custom_call.1} parent=5 // pred_check
        %p199 = pneg %p198
      $region22: #{tpu_custom_call.1} parent=5 // pred_check_branch
        %201 = sbr.rel (%p199) target = $region24
      $region23: #{tpu_custom_call.1} parent=5 // pred_region
        // Predicated region
        $region25: #{tpu_custom_call.1} parent=23 // pred_check
          %p202 = pneg %p62
        $region26: #{tpu_custom_call.1} parent=23 // pred_check_branch
          %204 = sbr.rel (%p202) target = $region28
        $region27: #{tpu_custom_call.1} parent=23 // pred_region
          %s205 = sand.u32 %s52, 1
          %s206 = scalar_lea.sflag [#allocation4], %s205
          %s207 = sand.u32 %s52, 1
          %s208 = smul.addr %s207, 8
          %s209 = scalar_lea.vmem [#allocation3], %s208
          %211 = vsyncadd %s206, 0
          %s212 = sadd.s32 %s28, %s27
          %s213 = sadd.s32 %s212, %s26
          %s214 = smul.addr %s213, 8
          %s215 = scalar_lea.hbm %s0, %s214
          %s217 = sshll.u32 %s215, 4
          %s218 = int_to_ptr.hbm [resolvable:$true] %s217
          %s219 = sshll.u32 %s209, 4
          %s220 = int_to_ptr.vmem [resolvable:$true] %s219
          %222 = dma.hbm_to_vmem [thread:$0]  %s218, 128, %s220, %s206
        $region28: #{tpu_custom_call.1} parent=23 // pred_fallthru
          _
        // Predicated region
        $region29: #{tpu_custom_call.1} parent=23 // pred_check
          %p223 = pneg %p90
        $region30: #{tpu_custom_call.1} parent=23 // pred_check_branch
          %225 = sbr.rel (%p223) target = $region32
        $region31: #{tpu_custom_call.1} parent=23 // pred_region
          %s226 = sand.u32 %s19, 1
          %s227 = scalar_lea.sflag [#allocation7], %s226
          %s228 = sand.u32 %s80, 1
          %s229 = smul.addr %s228, 8
          %s230 = scalar_lea.vmem [#allocation6], %s229
          %232 = vsyncadd %s227, 0
          %s233 = sadd.s32 %s28, %s26
          %s234 = smul.addr %s233, 8
          %s235 = scalar_lea.hbm %s1, %s234
          %s237 = sshll.u32 %s235, 4
          %s238 = int_to_ptr.hbm [resolvable:$true] %s237
          %s239 = sshll.u32 %s230, 4
          %s240 = int_to_ptr.vmem [resolvable:$true] %s239
          %242 = dma.hbm_to_vmem [thread:$0]  %s238, 128, %s240, %s227
        $region32: #{tpu_custom_call.1} parent=23 // pred_fallthru
          _
      $region24: #{tpu_custom_call.1} parent=5 // pred_fallthru
        _
      %p243 = scmp.le.s32.totalorder 1, %s19
      %p244 = scmp.lt.s32.totalorder %s19, 3
      %p245 = pnand %p243, %p244
      %p246 = pneg %p245
      // Predicated region
      $region33: #{tpu_custom_call.1} parent=5 // pred_check
        _
      $region34: #{tpu_custom_call.1} parent=5 // pred_check_branch
        %248 = sbr.rel (%p245) target = $region36
      $region35: #{tpu_custom_call.1} parent=5 // pred_region
        %s249 = ssub.s32 %s19, 1
        %s250 = sand.u32 %s55, 1
        %s251 = scalar_lea.sflag [#allocation4], %s250
        %s252 = sand.u32 %s55, 1
        %s253 = smul.addr %s252, 8
        %s254 = scalar_lea.vmem [#allocation3], %s253
        // Predicated region
        $region37: #{tpu_custom_call.1} parent=35 // pred_check
          %p255 = pneg %p68
        $region38: #{tpu_custom_call.1} parent=35 // pred_check_branch
          %257 = sbr.rel (%p255) target = $region40
        $region39: #{tpu_custom_call.1} parent=35 // pred_region
          %259 = dma.done %s251, 128
        $region40: #{tpu_custom_call.1} parent=35 // pred_fallthru
          _
        %s260 = sand.u32 %s24, 1
        %s261 = scalar_lea.sflag [#allocation7], %s260
        %s262 = sand.u32 %s83, 1
        %s263 = smul.addr %s262, 8
        %s264 = scalar_lea.vmem [#allocation6], %s263
        // Predicated region
        $region41: #{tpu_custom_call.1} parent=35 // pred_check
          %p265 = pneg %p96
        $region42: #{tpu_custom_call.1} parent=35 // pred_check_branch
          %267 = sbr.rel (%p265) target = $region44
        $region43: #{tpu_custom_call.1} parent=35 // pred_region
          %269 = dma.done %s261, 128
        $region44: #{tpu_custom_call.1} parent=35 // pred_fallthru
          _
        // Predicated region
        $region45: #{tpu_custom_call.1} parent=35 // pred_check
          %p270 = pneg %p117
        $region46: #{tpu_custom_call.1} parent=35 // pred_check_branch
          %272 = sbr.rel (%p270) target = $region48
        $region47: #{tpu_custom_call.1} parent=35 // pred_region
          %274 = dma.done [#allocation7], 256
        $region48: #{tpu_custom_call.1} parent=35 // pred_fallthru
          _
        %s275 = sand.u32 %s55, 1
        %s276 = scalar_lea.sflag [#allocation4], %s275
        %s277 = sand.u32 %s55, 1
        %s278 = smul.addr %s277, 8
        %s279 = scalar_lea.vmem [#allocation3], %s278
        %p280 = pneg %p68
        %p281 = pneg %p65
        %s282 = sand.u32 %s24, 1
        %s283 = scalar_lea.sflag [#allocation7], %s282
        %s284 = sand.u32 %s83, 1
        %s285 = smul.addr %s284, 8
        %s286 = scalar_lea.vmem [#allocation6], %s285
        %p287 = pneg %p96
        %p288 = pneg %p93
        %p289 = pneg %p117
        %p290 = pneg %p114
        %p291 = pneg %p138
        %p292 = pneg %p135
        %p293 = pneg %p166
        %p294 = pneg %p163
        %s295 = sand.u32 %s153, 1
        %s296 = scalar_lea.sflag [#allocation5], %s295
        %s297 = sand.u32 %s153, 1
        %s298 = smul.addr %s297, 8
        %s299 = scalar_lea.vmem [#allocation9], %s298
        %p300 = scmp.eq.s32.totalorder %s31, 0
        // Predicated region
        $region49: #{tpu_custom_call.1} parent=35 // pred_check
          %p301 = pneg %p300
        $region50: #{tpu_custom_call.1} parent=35 // pred_check_branch
          %303 = sbr.rel (%p301) target = $region52
        $region51: #{tpu_custom_call.1} parent=35 // pred_region
          %304 = vst [vmem:[#allocation2] sm:$0xff] 0.0
        $region52: #{tpu_custom_call.1} parent=35 // pred_fallthru
          _
        %v305 = vld [vmem:[%s254] sm:$0xff]
        %v306 = vld [vmem:[%s264] sm:$0xff]
        %v307 = vld [vmem:[#allocation8] sm:$0xff]
        %v308 = vld [vmem:[#allocation8 + $0x8] sm:$0xff]
        %vm309 = vcmask 130048
        %v311 = vsel %vm309, %v306, 0
        %313 = vmatpush.msra.mxu0 0.0
        %314 = vmatpush.msra.mxu0 0.0
        %315 = vmatpush.msra.mxu0 0.0
        %316 = vmatpush.msra.mxu0 0.0
        %317 = vmatpush.msra.mxu0 0.0
        %318 = vmatpush.msra.mxu0 0.0
        %319 = vmatpush.msra.mxu0 0.0
        %320 = vmatpush.msra.mxu0 0.0
        %321 = vmatpush.msra.mxu0 0.0
        %322 = vmatpush.msra.mxu0 0.0
        %323 = vmatpush.msra.mxu0 0.0
        %324 = vmatpush.msra.mxu0 0.0
        %325 = vmatpush.msra.mxu0 0.0
        %326 = vmatpush.msra.mxu0 0.0
        %327 = vmatpush.msra.mxu0 %v308
        %328 = vmatpush.msra.mxu0 %v307
        %329 = vmatmul.f32.gmra.mxu0 %v311
        %v330 = vpop.f32.mrf.mxu0
        %v331 = vadd.f32 0.0, %v330
        %332 = vdwg.mxu0
        %v333 = vld [vmem:[#allocation2] sm:$0xff]
        %vm334 = vcmask 64512
        %v336 = vsel %vm334, %v305, 0
        %338 = vmatpush.msra.mxu0 0.0
        %339 = vmatpush.msra.mxu0 0.0
        %340 = vmatpush.msra.mxu0 0.0
        %341 = vmatpush.msra.mxu0 0.0
        %342 = vmatpush.msra.mxu0 0.0
        %343 = vmatpush.msra.mxu0 0.0
        %344 = vmatpush.msra.mxu0 0.0
        %345 = vmatpush.msra.mxu0 0.0
        %346 = vmatpush.msra.mxu0 0.0
        %347 = vmatpush.msra.mxu0 0.0
        %348 = vmatpush.msra.mxu0 0.0
        %349 = vmatpush.msra.mxu0 0.0
        %350 = vmatpush.msra.mxu0 0.0
        %351 = vmatpush.msra.mxu0 0.0
        %352 = vmatpush.msra.mxu0 0.0
        %353 = vmatpush.msra.mxu0 %v331
        %354 = vmatmul.f32.gmra.mxu0 %v336
        %v355 = vpop.f32.mrf.mxu0
        %v356 = vadd.f32 0.0, %v355
        %357 = vdwg.mxu0
        %v358 = vadd.f32 %v333, %v356
        %359 = vst [vmem:[#allocation2] sm:$0xff] %v358
        // Predicated region
        $region53: #{tpu_custom_call.1} parent=35 // pred_check
          %p360 = pneg %p300
        $region54: #{tpu_custom_call.1} parent=35 // pred_check_branch
          %362 = sbr.rel (%p360) target = $region56
        $region55: #{tpu_custom_call.1} parent=35 // pred_region
          %v363 = vld [vmem:[#allocation2] sm:$0xff]
          %v364 = vld [vmem:[%s3] sm:$0x1]
          %v366 = vperm.slane %v364, 0
          %v368 = vadd.f32 %v363, %v366
          %v369 = vmax.f32 %v368, 0.0
          %370 = vst [vmem:[%s299] sm:$0xff] %v369
        $region56: #{tpu_custom_call.1} parent=35 // pred_fallthru
          _
        %s371 = sand.u32 %s153, 1
        %s372 = scalar_lea.sflag [#allocation5], %s371
        %s373 = sand.u32 %s153, 1
        %s374 = smul.addr %s373, 8
        %s375 = scalar_lea.vmem [#allocation9], %s374
        // Predicated region
        $region57: #{tpu_custom_call.1} parent=35 // pred_check
          %p376 = pneg %p163
        $region58: #{tpu_custom_call.1} parent=35 // pred_check_branch
          %378 = sbr.rel (%p376) target = $region60
        $region59: #{tpu_custom_call.1} parent=35 // pred_region
          %380 = vsyncadd %s372, 0
          %s381 = sadd.s32 %s30, %s29
          %s382 = smul.addr %s381, 8
          %s383 = scalar_lea.hbm %s4, %s382
          %s385 = sshll.u32 %s375, 4
          %s386 = int_to_ptr.vmem [resolvable:$true] %s385
          %s387 = sshll.u32 %s383, 4
          %s388 = int_to_ptr.hbm [resolvable:$true] %s387
          %390 = dma.vmem_to_hbm [thread:$0]  %s386, 128, %s388, %s372
        $region60: #{tpu_custom_call.1} parent=35 // pred_fallthru
          _
      $region36: #{tpu_custom_call.1} parent=5 // pred_fallthru
        _
      %p391 = scmp.le.s32.totalorder 2, %s19
      // Predicated region
      $region61: #{tpu_custom_call.1} parent=5 // pred_check
        %p392 = pneg %p391
      $region62: #{tpu_custom_call.1} parent=5 // pred_check_branch
        %394 = sbr.rel (%p392) target = $region64
      $region63: #{tpu_custom_call.1} parent=5 // pred_region
        %s395 = ssub.s32 %s19, 2
        // Predicated region
        $region65: #{tpu_custom_call.1} parent=63 // pred_check
          %p396 = pneg %p169
        $region66: #{tpu_custom_call.1} parent=63 // pred_check_branch
          %398 = sbr.rel (%p396) target = $region68
        $region67: #{tpu_custom_call.1} parent=63 // pred_region
          %s399 = sand.u32 %s154, 1
          %s400 = scalar_lea.sflag [#allocation5], %s399
          %s401 = sand.u32 %s154, 1
          %s402 = smul.addr %s401, 8
          %s403 = scalar_lea.vmem [#allocation9], %s402
          %405 = dma.done %s400, 128
        $region68: #{tpu_custom_call.1} parent=63 // pred_fallthru
          _
      $region64: #{tpu_custom_call.1} parent=5 // pred_fallthru
        _
    $region6: #{tpu_custom_call.1} parent=1 // loop_footer
      %s23 = sadd.s32 1, %s19
    $region7: #{tpu_custom_call.1} parent=1 // loop_footer_branch
      %18 = sbr.rel target = $region3
    $region8: #{tpu_custom_call.1} parent=1 // loop_exit
      _
    %406 = vsyncpa [#allocation4], 1
    %s407 = scalar_lea.sflag [#allocation4], 1
    %408 = vsyncpa %s407, 1
    %409 = vsyncpa [#allocation7], 1
    %s410 = scalar_lea.sflag [#allocation7], 1
    %411 = vsyncpa %s410, 1
    %412 = vsyncpa [#allocation5], 1
    %s413 = scalar_lea.sflag [#allocation5], 1
    %414 = vsyncpa %s413, 1

</llo_original>
